<compile_context>
chip_gen: v7x
topology: tpu7x:2x2x1
jax: 0.10.0
libtpu: 0.0.40
codegen_flags: <defaults>
</compile_context>

<pallas_src>
import jax
import jax.numpy as jnp
import numpy as np
from jax.experimental import pallas as pl
from jax.experimental.pallas import tpu as pltpu


def _make_smlp_kernel(c_tile):
    def kernel(x_ref, w_ref, mh_ref, mw_ref, cb_ref, rb_ref, out_ref):
        f32 = jnp.float32
        cdt = mh_ref.dtype

        x = x_ref[...]                                    # (C_pad, HW)
        w = w_ref[...]                                    # (3*c_tile, C_pad)

        # One fused channel-mix matmul for all three branches.
        a = jnp.dot(w, x, preferred_element_type=f32)     # (3*c_tile, HW) f32
        a1 = a[0 * c_tile:1 * c_tile]                     # proj_h branch, pre-mix
        a2 = a[1 * c_tile:2 * c_tile]                     # proj_w branch, pre-mix
        a3 = a[2 * c_tile:3 * c_tile]                     # identity branch

        # Identity branch + bias rebuilt from rank-1 pieces (VPU broadcast FMAs):
        #   bias[o, h*W+w] = rowsum(W1)[o]*bh[h] + rowsum(W2)[o]*bw[w] + bf[o]
        cb = cb_ref[...]                                  # (c_tile, 3) f32
        rb = rb_ref[...]                                  # (2, HW)     f32
        acc = a3 + cb[:, 0:1] * rb[0:1, :] + cb[:, 1:2] * rb[1:2, :] + cb[:, 2:3]

        # H-mix branch: lane-dense (c_tile, HW) @ (HW, HW) kron matmul.
        acc = acc + jnp.dot(a1.astype(cdt), mh_ref[...],
                            preferred_element_type=f32)
        # W-mix branch.
        acc = acc + jnp.dot(a2.astype(cdt), mw_ref[...],
                            preferred_element_type=f32)

        out_ref[...] = acc.astype(out_ref.dtype)

    return kernel


def _vmem_estimate(C_pad, HW, c_tile, cdt_bytes, out_bytes):
    x_b = 2 * C_pad * HW * cdt_bytes            # double-buffered x slab
    w_b = 2 * 3 * c_tile * C_pad * cdt_bytes    # double-buffered channel weights
    kron_b = 2 * 2 * HW * HW * cdt_bytes        # MhT + MwT (double-buffered)
    out_b = 2 * c_tile * HW * out_bytes         # double-buffered output block
    tmp_b = 5 * c_tile * HW * 4                 # live f32 temporaries (rough)
    return x_b + w_b + kron_b + out_b + tmp_b


def _choose_c_tile(C_pad, HW, B, sub, cdt_bytes, out_bytes,
                   budget=40 * 1024 * 1024):
    cands = [d for d in range(sub, C_pad + 1, sub) if C_pad % d == 0]
    fit = [d for d in cands
           if _vmem_estimate(C_pad, HW, d, cdt_bytes, out_bytes) <= budget]
    c_tile = max(fit) if fit else cands[0]
    # Guarantee >1 grid step when B == 1 (pipelining / megacore occupancy).
    if B == 1 and C_pad // c_tile < 2:
        smaller = [d for d in cands if d < C_pad]
        if smaller:
            c_tile = max(smaller)
    return c_tile


def smlp_block(x, params, *, c_tile=None, compute_dtype=None):
    """Forward pass of sMLPBlock. x: (B, C, H, W), NCHW like the PyTorch module."""
    B, C, H, W = x.shape
    HW = H * W
    assert HW % 128 == 0, "H*W must be a multiple of 128 for lane-dense blocks"
    # TODO(synk): for HW > 1024 the (HW, HW) kron slabs get large; fall back to
    # per-axis spatial matmuls tiled over the opposite axis in that regime.
    assert HW <= 1024, "kron spatial-mix path is gated on H*W <= 1024"

    cdt = x.dtype if compute_dtype is None else jnp.dtype(compute_dtype)
    cdt_bytes = jnp.dtype(cdt).itemsize
    out_dt = x.dtype
    out_bytes = jnp.dtype(out_dt).itemsize
    sub = 8 if cdt_bytes >= 4 else 32 // cdt_bytes   # sublane multiple (f32:8, bf16:16)

    C_pad = max(sub, ((C + sub - 1) // sub) * sub)
    if c_tile is None:
        c_tile = _choose_c_tile(C_pad, HW, B, sub, cdt_bytes, out_bytes)
    assert C_pad % c_tile == 0 and c_tile % sub == 0
    nct = C_pad // c_tile

    Wh, bh = params["proj_h_w"], params["proj_h_b"]
    Ww, bw = params["proj_w_w"], params["proj_w_b"]
    Wf, bf = params["fuse_w"], params["fuse_b"]
    w1, w2, w3 = Wf[:, 0:C], Wf[:, C:2 * C], Wf[:, 2 * C:3 * C]   # (C, C) each

    def pad_cc(m):   # (C, C) -> (C_pad, C_pad), zero fill
        return jnp.pad(m, ((0, C_pad - C), (0, C_pad - C)))

    w1p, w2p, w3p = pad_cc(w1), pad_cc(w2), pad_cc(w3)

    # Pack the three channel-mix weights so each grid step reads one contiguous
    # (3*c_tile, C_pad) row block: [W1 tile ci; W2 tile ci; W3 tile ci].
    w_arr = (jnp.stack([w1p, w2p, w3p], axis=0)           # (3, C_pad, C_pad)
             .reshape(3, nct, c_tile, C_pad)
             .transpose(1, 0, 2, 3)
             .reshape(nct * 3 * c_tile, C_pad)).astype(cdt)

    # Lane-dense spatial-mix weights:  y1 = a1 @ MhT,  y2 = a2 @ MwT.
    MhT = jnp.kron(Wh, jnp.eye(W, dtype=Wh.dtype)).T.astype(cdt)  # (HW, HW)
    MwT = jnp.kron(jnp.eye(H, dtype=Ww.dtype), Ww).T.astype(cdt)  # (HW, HW)

    # Rank-1 bias pieces, combined in-kernel.
    cbias = jnp.stack(
        [w1p.sum(1), w2p.sum(1), jnp.pad(bf, (0, C_pad - C))], axis=1
    ).astype(jnp.float32)                                         # (C_pad, 3)
    rbias = jnp.stack(
        [jnp.repeat(bh, W), jnp.tile(bw, H)], axis=0
    ).astype(jnp.float32)                                         # (2, HW)

    x3 = jnp.pad(x.reshape(B, C, HW),
                 ((0, 0), (0, C_pad - C), (0, 0))).astype(cdt)    # (B, C_pad, HW)

    est = _vmem_estimate(C_pad, HW, c_tile, cdt_bytes, out_bytes)
    vmem_limit = None
    if est > 24 * 1024 * 1024:
        # Lift the 16/32 MiB scoped defaults while staying under v7x's 64 MiB.
        vmem_limit = 48 * 1024 * 1024

    # B >= 2: megacore splits on batch (channel split would duplicate the x-slab
    # HBM reads across the two v7x cores); B == 1: split on channel tiles.
    dim_sem = ("parallel", "arbitrary") if B >= 2 else ("arbitrary", "parallel")

    kernel = _make_smlp_kernel(c_tile)

    # NOTE: the x / kron / bias blocks have constant (or batch-only) indices; on
    # VMEM-tight v7x shapes pipeline_mode=pl.Buffered(1) on them would free one
    # buffer copy each -- omitted here to keep the default, well-tested path.
    out3 = pl.pallas_call(
        kernel,
        out_shape=jax.ShapeDtypeStruct((B, C_pad, HW), out_dt),
        grid=(B, nct),
        in_specs=[
            pl.BlockSpec((pl.Squeezed(), C_pad, HW), lambda b, ci: (b, 0, 0)),  # x slab
            pl.BlockSpec((3 * c_tile, C_pad), lambda b, ci: (ci, 0)),           # W1/W2/W3 tile
            pl.BlockSpec((HW, HW), lambda b, ci: (0, 0)),                       # kron(Wh,I).T
            pl.BlockSpec((HW, HW), lambda b, ci: (0, 0)),                       # kron(I,Ww).T
            pl.BlockSpec((c_tile, 3), lambda b, ci: (ci, 0)),                   # bias columns
            pl.BlockSpec((2, HW), lambda b, ci: (0, 0)),                        # bias rows
        ],
        out_specs=pl.BlockSpec((pl.Squeezed(), c_tile, HW),
                               lambda b, ci: (b, ci, 0)),
        compiler_params=pltpu.CompilerParams(
            dimension_semantics=dim_sem,
            vmem_limit_bytes=vmem_limit),
    )(x3, w_arr, MhT, MwT, cbias, rbias)

    return out3[:, :C, :].reshape(B, C, H, W)


def init_params(key, h, w, d_model):
    """Deterministic PyTorch-default-style init (uniform +-1/sqrt(fan_in))."""
    ks = jax.random.split(key, 6)

    def u(k, shape, fan_in):
        bound = 1.0 / np.sqrt(fan_in)
        return jax.random.uniform(k, shape, jnp.float32, -bound, bound)

    return {
        "proj_h_w": u(ks[0], (h, h), h),
        "proj_h_b": u(ks[1], (h,), h),
        "proj_w_w": u(ks[2], (w, w), w),
        "proj_w_b": u(ks[3], (w,), w),
        # Conv2d(3*d_model, d_model, 1) weight squeezed to (d_model, 3*d_model)
        "fuse_w": u(ks[4], (d_model, 3 * d_model), 3 * d_model),
        "fuse_b": u(ks[5], (d_model,), 3 * d_model),
    }


def ref_forward(x, params):
    """Pure-JAX reference mirroring the PyTorch module exactly (NCHW)."""
    Wh, bh = params["proj_h_w"], params["proj_h_b"]
    Ww, bw = params["proj_w_w"], params["proj_w_b"]
    Wf, bf = params["fuse_w"], params["fuse_b"]
    x_h = jnp.einsum("ij,bcjw->bciw", Wh, x) + bh[None, None, :, None]
    x_w = jnp.einsum("ij,bchj->bchi", Ww, x) + bw[None, None, None, :]
    cat = jnp.concatenate([x_h, x_w, x], axis=1)
    out = jnp.einsum("oc,bchw->bohw", Wf, cat) + bf[None, :, None, None]
    return out


if __name__ == "__main__":
    B, d_model, H, W = 2, 4, 16, 16
    key = jax.random.PRNGKey(0)
    k_x, k_p = jax.random.split(key)
    x = jax.random.normal(k_x, (B, d_model, H, W), dtype=jnp.float32)
    params = init_params(k_p, H, W, d_model)

    out = jax.block_until_ready(smlp_block(x, params))
    ref = jax.block_until_ready(ref_forward(x, params))
    np.testing.assert_allclose(np.asarray(out), np.asarray(ref),
                               rtol=1e-3, atol=1e-3)
    print("KERNEL_OK")
</pallas_src>

<mosaic_0001>
module attributes {stable_mosaic.version = 11 : i64} {
  func.func @kernel(%arg0: i32, %arg1: i32, %arg2: memref<1x8x256xf32, #tpu.memory_space<vmem>>, %arg3: memref<24x8xf32, #tpu.memory_space<vmem>>, %arg4: memref<256x256xf32, #tpu.memory_space<vmem>>, %arg5: memref<256x256xf32, #tpu.memory_space<vmem>>, %arg6: memref<8x3xf32, #tpu.memory_space<vmem>>, %arg7: memref<2x256xf32, #tpu.memory_space<vmem>>, %arg8: memref<1x8x256xf32, #tpu.memory_space<vmem>>) attributes {dimension_semantics = [#tpu.dimension_semantics<parallel>, #tpu.dimension_semantics<arbitrary>], iteration_bounds = array<i64: 2, 1>, scalar_prefetch = 0 : i64, scratch_operands = 0 : i64, tpu.core_type = #tpu.core_type<tc>, window_params = [{transform_indices = @transform_0, window_bounds = array<i64: 1, 8, 256>}, {transform_indices = @transform_1, window_bounds = array<i64: 24, 8>}, {pipeline_mode = #tpu.pipeline_mode<synchronous>, transform_indices = @transform_2, window_bounds = array<i64: 256, 256>}, {pipeline_mode = #tpu.pipeline_mode<synchronous>, transform_indices = @transform_3, window_bounds = array<i64: 256, 256>}, {transform_indices = @transform_4, window_bounds = array<i64: 8, 3>}, {pipeline_mode = #tpu.pipeline_mode<synchronous>, transform_indices = @transform_5, window_bounds = array<i64: 2, 256>}, {transform_indices = @transform_6, window_bounds = array<i64: 1, 8, 256>}]} {
    %c0 = arith.constant 0 : index
    %c0_0 = arith.constant 0 : index
    %c0_1 = arith.constant 0 : index
    %0 = vector.load %arg2[%c0, %c0_0, %c0_1] : memref<1x8x256xf32, #tpu.memory_space<vmem>>, vector<1x8x256xf32>
    %1 = vector.shape_cast %0 : vector<1x8x256xf32> to vector<8x256xf32>
    %c0_2 = arith.constant 0 : index
    %c0_3 = arith.constant 0 : index
    %2 = vector.load %arg3[%c0_2, %c0_3] : memref<24x8xf32, #tpu.memory_space<vmem>>, vector<24x8xf32>
    %cst = arith.constant dense<0.000000e+00> : vector<24x256xf32>
    %3 = tpu.matmul %2, %1, %cst {dimension_numbers = #tpu.dot_dimension_numbers<[1], [0], [0], [1], [0, 0, 1, 1], [], []>} : vector<24x8xf32>, vector<8x256xf32>, vector<24x256xf32> -> vector<24x256xf32>
    %4 = vector.extract_strided_slice %3 {offsets = [0, 0], sizes = [8, 256], strides = [1, 1]} : vector<24x256xf32> to vector<8x256xf32>
    %5 = vector.extract_strided_slice %3 {offsets = [8, 0], sizes = [8, 256], strides = [1, 1]} : vector<24x256xf32> to vector<8x256xf32>
    %6 = vector.extract_strided_slice %3 {offsets = [16, 0], sizes = [8, 256], strides = [1, 1]} : vector<24x256xf32> to vector<8x256xf32>
    %c0_4 = arith.constant 0 : index
    %c0_5 = arith.constant 0 : index
    %7 = vector.load %arg6[%c0_4, %c0_5] : memref<8x3xf32, #tpu.memory_space<vmem>>, vector<8x3xf32>
    %c0_6 = arith.constant 0 : index
    %c0_7 = arith.constant 0 : index
    %8 = vector.load %arg7[%c0_6, %c0_7] : memref<2x256xf32, #tpu.memory_space<vmem>>, vector<2x256xf32>
    %9 = vector.extract_strided_slice %7 {offsets = [0, 0], sizes = [8, 1], strides = [1, 1]} : vector<8x3xf32> to vector<8x1xf32>
    %10 = vector.extract_strided_slice %8 {offsets = [0, 0], sizes = [1, 256], strides = [1, 1]} : vector<2x256xf32> to vector<1x256xf32>
    %11 = vector.broadcast %9 : vector<8x1xf32> to vector<8x256xf32>
    %12 = vector.broadcast %10 : vector<1x256xf32> to vector<8x256xf32>
    %13 = arith.mulf %11, %12 : vector<8x256xf32>
    %14 = arith.addf %6, %13 : vector<8x256xf32>
    %15 = vector.extract_strided_slice %7 {offsets = [0, 1], sizes = [8, 1], strides = [1, 1]} : vector<8x3xf32> to vector<8x1xf32>
    %16 = vector.extract_strided_slice %8 {offsets = [1, 0], sizes = [1, 256], strides = [1, 1]} : vector<2x256xf32> to vector<1x256xf32>
    %17 = vector.broadcast %15 : vector<8x1xf32> to vector<8x256xf32>
    %18 = vector.broadcast %16 : vector<1x256xf32> to vector<8x256xf32>
    %19 = arith.mulf %17, %18 : vector<8x256xf32>
    %20 = arith.addf %14, %19 : vector<8x256xf32>
    %21 = vector.extract_strided_slice %7 {offsets = [0, 2], sizes = [8, 1], strides = [1, 1]} : vector<8x3xf32> to vector<8x1xf32>
    %22 = vector.broadcast %21 : vector<8x1xf32> to vector<8x256xf32>
    %23 = arith.addf %20, %22 : vector<8x256xf32>
    %c0_8 = arith.constant 0 : index
    %c0_9 = arith.constant 0 : index
    %24 = vector.load %arg4[%c0_8, %c0_9] : memref<256x256xf32, #tpu.memory_space<vmem>>, vector<256x256xf32>
    %cst_10 = arith.constant dense<0.000000e+00> : vector<8x256xf32>
    %25 = tpu.matmul %4, %24, %cst_10 {dimension_numbers = #tpu.dot_dimension_numbers<[1], [0], [0], [1], [0, 0, 1, 1], [], []>} : vector<8x256xf32>, vector<256x256xf32>, vector<8x256xf32> -> vector<8x256xf32>
    %26 = arith.addf %23, %25 : vector<8x256xf32>
    %c0_11 = arith.constant 0 : index
    %c0_12 = arith.constant 0 : index
    %27 = vector.load %arg5[%c0_11, %c0_12] : memref<256x256xf32, #tpu.memory_space<vmem>>, vector<256x256xf32>
    %cst_13 = arith.constant dense<0.000000e+00> : vector<8x256xf32>
    %28 = tpu.matmul %5, %27, %cst_13 {dimension_numbers = #tpu.dot_dimension_numbers<[1], [0], [0], [1], [0, 0, 1, 1], [], []>} : vector<8x256xf32>, vector<256x256xf32>, vector<8x256xf32> -> vector<8x256xf32>
    %29 = arith.addf %26, %28 : vector<8x256xf32>
    %c0_14 = arith.constant 0 : index
    %c0_15 = arith.constant 0 : index
    %c0_16 = arith.constant 0 : index
    %30 = vector.load %arg8[%c0_14, %c0_15, %c0_16] : memref<1x8x256xf32, #tpu.memory_space<vmem>>, vector<1x8x256xf32>
    %31 = vector.shape_cast %30 : vector<1x8x256xf32> to vector<8x256xf32>
    %32 = vector.shape_cast %29 : vector<8x256xf32> to vector<1x8x256xf32>
    tpu.vector_store %arg8[%c0_14, %c0_15, %c0_16], %32 {strides = array<i32>} : memref<1x8x256xf32, #tpu.memory_space<vmem>>, vector<1x8x256xf32>,
    return
  }
  func.func @transform_0(%arg0: i32, %arg1: i32) -> (i32, i32, i32) {
    %c0_i32 = arith.constant 0 : i32
    %c0_i32_0 = arith.constant 0 : i32
    %c0_i32_1 = arith.constant 0 : i32
    return %arg0, %c0_i32, %c0_i32_0 : i32, i32, i32
  }
  func.func @transform_1(%arg0: i32, %arg1: i32) -> (i32, i32) {
    %c0_i32 = arith.constant 0 : i32
    %c0_i32_0 = arith.constant 0 : i32
    return %arg1, %c0_i32 : i32, i32
  }
  func.func @transform_2(%arg0: i32, %arg1: i32) -> (i32, i32) {
    %c0_i32 = arith.constant 0 : i32
    %c0_i32_0 = arith.constant 0 : i32
    %c0_i32_1 = arith.constant 0 : i32
    return %c0_i32, %c0_i32_0 : i32, i32
  }
  func.func @transform_3(%arg0: i32, %arg1: i32) -> (i32, i32) {
    %c0_i32 = arith.constant 0 : i32
    %c0_i32_0 = arith.constant 0 : i32
    %c0_i32_1 = arith.constant 0 : i32
    return %c0_i32, %c0_i32_0 : i32, i32
  }
  func.func @transform_4(%arg0: i32, %arg1: i32) -> (i32, i32) {
    %c0_i32 = arith.constant 0 : i32
    %c0_i32_0 = arith.constant 0 : i32
    return %arg1, %c0_i32 : i32, i32
  }
  func.func @transform_5(%arg0: i32, %arg1: i32) -> (i32, i32) {
    %c0_i32 = arith.constant 0 : i32
    %c0_i32_0 = arith.constant 0 : i32
    %c0_i32_1 = arith.constant 0 : i32
    return %c0_i32, %c0_i32_0 : i32, i32
  }
  func.func @transform_6(%arg0: i32, %arg1: i32) -> (i32, i32, i32) {
    %c0_i32 = arith.constant 0 : i32
    %c0_i32_0 = arith.constant 0 : i32
    return %arg0, %arg1, %c0_i32 : i32, i32, i32
  }
}

</mosaic_0001>

<llo_original>
// kernel: tpu_custom_call.1
$region0: #{tpu_custom_call.1}
  #allocation0 [shape = 'u32[]', space=smem, size = 0x4, offset = 0x4, fixed_abs, tag = 'smem constant byte address 0x4 - core index']
  #allocation1 [shape = 'u32[144,128]{1,0:T(1,128)}', space=vmem, size = 0x12000, scoped, tag = 'internal scratch']
  %s0 = inlined_call_operand.vmem [shape: f32[2,8,256], index: 0, kind: input, shape index: {}]
  %s1 = inlined_call_operand.vmem [shape: f32[24,8], index: 1, kind: input, shape index: {}]
  %s2 = inlined_call_operand.hbm [shape: f32[256,256], index: 2, kind: input, shape index: {}]
  %s3 = inlined_call_operand.hbm [shape: f32[256,256], index: 3, kind: input, shape index: {}]
  %s4 = inlined_call_operand.vmem [shape: f32[8,3], index: 4, kind: input, shape index: {}]
  %s5 = inlined_call_operand.vmem [shape: f32[2,256], index: 5, kind: input, shape index: {}]
  %s6 = inlined_call_operand.hbm [shape: f32[2,8,256], index: 6, kind: output, shape index: {}]
  %s7 = sld [smem:[#allocation0]]
  $region65: #{tpu_custom_call.1} parent=0
    _
  %s9 = ssub.s32 1, %s7
  %s10 = scalar_select 0, %s9, %s7
  $region1: #{tpu_custom_call.1} parent=0
    #allocation2 [shape = 'u8[262144]{0}', space=vmem, size = 0x40000, scoped, tag = 'input window, operand 2, single buffered']
    #allocation3 [shape = 's32[2]{0}', space=sflag, size = 0x8, scoped, tag = 'scoped memory for tpu_custom_call.1']
    #allocation4 [shape = 's32[2]{0}', space=sflag, size = 0x8, scoped, tag = 'scoped memory for tpu_custom_call.1']
    #allocation5 [shape = 'u8[262144]{0}', space=vmem, size = 0x40000, scoped, tag = 'input window, operand 3, single buffered']
    #allocation6 [shape = 's32[1]{0}', space=sflag, size = 0x4, scoped, tag = 'scoped memory for tpu_custom_call.1']
    #allocation7 [shape = 'u8[16384]{0}', space=vmem, size = 0x4000, scoped, tag = 'output window, operand 0']
    %11 = vsyncpa [#allocation3], 0
    %12 = vsyncpa [#allocation6], 0
    %13 = vsyncpa [#allocation4], 0
    %s14 = scalar_lea.sflag [#allocation4], 1
    %15 = vsyncpa %s14, 0
    loop: start=0, step=1, limit=4
    $region2: #{tpu_custom_call.1} parent=1 // loop_pre_header
      _
    $region3: #{tpu_custom_call.1} parent=1 // loop_header
      %s17 = sphi 0, %s21
      %p18 = scmp.ge.s32.totalorder %s17, 4
      %s24 = sphi 0, %s36
      %s25 = sphi 0, %s32
      %s26 = sphi 0, %s24
      %s27 = sphi 0, %s25
      %s28 = sphi 0, %s26
      %s29 = sphi 0, %s27
      %s39 = sphi 0, %s41
      %s42 = sphi 0, %s39
      %s43 = sphi 0, %s42
      %s59 = sphi 0, %s43
      %s65 = sphi 0, %s67
      %s68 = sphi 0, %s65
      %s69 = sphi 0, %s68
      %s85 = sphi 0, %s69
      %s89 = sphi 0, %s89
      %s91 = sphi 0, %s89
      %s92 = sphi 0, %s91
      %s106 = sphi 0, %s92
      %s110 = sphi 0, %s110
      %s112 = sphi 0, %s110
      %s113 = sphi 0, %s112
      %s127 = sphi 0, %s113
      %s133 = sphi 0, %s135
      %s136 = sphi 0, %s133
      %s137 = sphi 0, %s136
      %s153 = sphi 0, %s137
      %s157 = sphi 0, %s157
      %s159 = sphi 0, %s157
      %s160 = sphi 0, %s159
      %s174 = sphi 0, %s160
      %s182 = sphi 0, %s184
      %s185 = sphi 0, %s182
      %s186 = sphi 0, %s185
      %s202 = sphi 0, %s186
    $region4: #{tpu_custom_call.1} parent=1 // loop_header_branch
      %20 = sbr.rel (%p18) target = $region8
    $region5: #{tpu_custom_call.1} parent=1 // loop_body
      %s22 = ssub.s32 %s17, 1
      %s23 = ssub.s32 %s17, 2
      %s30 = sadd.s32 1, %s25
      %p31 = scmp.ge.s32.totalorder %s30, 1
      %s32 = scalar_select %p31, 0, %s30
      %s33 = sadd.s32 1, %s24
      %s34 = scalar_select %p31, %s33, %s24
      %p35 = scmp.ge.s32.totalorder %s34, 2
      %s36 = scalar_select %p35, 0, %s34
      %s37 = ssub.s32 %s24, %s36
      %p38 = scmp.eq.s32.totalorder %s37, 0
      %s40 = sadd.s32 %s39, 1
      %s41 = scalar_select %p38, %s39, %s40
      %p44 = pneg %p38
      %p45 = scmp.eq.s32.totalorder %s17, 1
      %p46 = por %p44, %p45
      %p47 = scmp.ne.s32.totalorder %s39, %s42
      %p48 = scmp.eq.s32.totalorder %s17, 0
      %p49 = por %p47, %p48
      %p50 = scmp.ne.s32.totalorder %s39, %s42
      %p51 = scmp.eq.s32.totalorder %s22, 1
      %p52 = por %p50, %p51
      %p53 = scmp.ne.s32.totalorder %s42, %s43
      %p54 = scmp.eq.s32.totalorder %s22, 0
      %p55 = por %p53, %p54
      %p56 = scmp.ne.s32.totalorder %s42, %s43
      %p57 = scmp.eq.s32.totalorder %s23, 1
      %p58 = por %p56, %p57
      %p60 = scmp.ne.s32.totalorder %s43, %s59
      %p61 = scmp.eq.s32.totalorder %s23, 0
      %p62 = por %p60, %p61
      %s63 = ssub.s32 %s25, %s32
      %p64 = scmp.eq.s32.totalorder %s63, 0
      %s66 = sadd.s32 %s65, 1
      %s67 = scalar_select %p64, %s65, %s66
      %p70 = pneg %p64
      %p71 = scmp.eq.s32.totalorder %s17, 1
      %p72 = por %p70, %p71
      %p73 = scmp.ne.s32.totalorder %s65, %s68
      %p74 = scmp.eq.s32.totalorder %s17, 0
      %p75 = por %p73, %p74
      %p76 = scmp.ne.s32.totalorder %s65, %s68
      %p77 = scmp.eq.s32.totalorder %s22, 1
      %p78 = por %p76, %p77
      %p79 = scmp.ne.s32.totalorder %s68, %s69
      %p80 = scmp.eq.s32.totalorder %s22, 0
      %p81 = por %p79, %p80
      %p82 = scmp.ne.s32.totalorder %s68, %s69
      %p83 = scmp.eq.s32.totalorder %s23, 1
      %p84 = por %p82, %p83
      %p86 = scmp.ne.s32.totalorder %s69, %s85
      %p87 = scmp.eq.s32.totalorder %s23, 0
      %p88 = por %p86, %p87
      %s90 = sadd.s32 %s89, 1
      %p93 = scmp.eq.s32.totalorder %s17, 1
      %p94 = scmp.ne.s32.totalorder %s89, %s91
      %p95 = scmp.eq.s32.totalorder %s17, 0
      %p96 = por %p94, %p95
      %p97 = scmp.ne.s32.totalorder %s89, %s91
      %p98 = scmp.eq.s32.totalorder %s22, 1
      %p99 = por %p97, %p98
      %p100 = scmp.ne.s32.totalorder %s91, %s92
      %p101 = scmp.eq.s32.totalorder %s22, 0
      %p102 = por %p100, %p101
      %p103 = scmp.ne.s32.totalorder %s91, %s92
      %p104 = scmp.eq.s32.totalorder %s23, 1
      %p105 = por %p103, %p104
      %p107 = scmp.ne.s32.totalorder %s92, %s106
      %p108 = scmp.eq.s32.totalorder %s23, 0
      %p109 = por %p107, %p108
      %s111 = sadd.s32 %s110, 1
      %p114 = scmp.eq.s32.totalorder %s17, 1
      %p115 = scmp.ne.s32.totalorder %s110, %s112
      %p116 = scmp.eq.s32.totalorder %s17, 0
      %p117 = por %p115, %p116
      %p118 = scmp.ne.s32.totalorder %s110, %s112
      %p119 = scmp.eq.s32.totalorder %s22, 1
      %p120 = por %p118, %p119
      %p121 = scmp.ne.s32.totalorder %s112, %s113
      %p122 = scmp.eq.s32.totalorder %s22, 0
      %p123 = por %p121, %p122
      %p124 = scmp.ne.s32.totalorder %s112, %s113
      %p125 = scmp.eq.s32.totalorder %s23, 1
      %p126 = por %p124, %p125
      %p128 = scmp.ne.s32.totalorder %s113, %s127
      %p129 = scmp.eq.s32.totalorder %s23, 0
      %p130 = por %p128, %p129
      %s131 = ssub.s32 %s25, %s32
      %p132 = scmp.eq.s32.totalorder %s131, 0
      %s134 = sadd.s32 %s133, 1
      %s135 = scalar_select %p132, %s133, %s134
      %p138 = pneg %p132
      %p139 = scmp.eq.s32.totalorder %s17, 1
      %p140 = por %p138, %p139
      %p141 = scmp.ne.s32.totalorder %s133, %s136
      %p142 = scmp.eq.s32.totalorder %s17, 0
      %p143 = por %p141, %p142
      %p144 = scmp.ne.s32.totalorder %s133, %s136
      %p145 = scmp.eq.s32.totalorder %s22, 1
      %p146 = por %p144, %p145
      %p147 = scmp.ne.s32.totalorder %s136, %s137
      %p148 = scmp.eq.s32.totalorder %s22, 0
      %p149 = por %p147, %p148
      %p150 = scmp.ne.s32.totalorder %s136, %s137
      %p151 = scmp.eq.s32.totalorder %s23, 1
      %p152 = por %p150, %p151
      %p154 = scmp.ne.s32.totalorder %s137, %s153
      %p155 = scmp.eq.s32.totalorder %s23, 0
      %p156 = por %p154, %p155
      %s158 = sadd.s32 %s157, 1
      %p161 = scmp.eq.s32.totalorder %s17, 1
      %p162 = scmp.ne.s32.totalorder %s157, %s159
      %p163 = scmp.eq.s32.totalorder %s17, 0
      %p164 = por %p162, %p163
      %p165 = scmp.ne.s32.totalorder %s157, %s159
      %p166 = scmp.eq.s32.totalorder %s22, 1
      %p167 = por %p165, %p166
      %p168 = scmp.ne.s32.totalorder %s159, %s160
      %p169 = scmp.eq.s32.totalorder %s22, 0
      %p170 = por %p168, %p169
      %p171 = scmp.ne.s32.totalorder %s159, %s160
      %p172 = scmp.eq.s32.totalorder %s23, 1
      %p173 = por %p171, %p172
      %p175 = scmp.ne.s32.totalorder %s160, %s174
      %p176 = scmp.eq.s32.totalorder %s23, 0
      %p177 = por %p175, %p176
      %s178 = ssub.s32 %s24, %s36
      %s179 = ssub.s32 %s25, %s32
      %s180 = sor.u32 %s178, %s179
      %p181 = scmp.eq.s32.totalorder %s180, 0
      %s183 = sadd.s32 %s182, 1
      %s184 = scalar_select %p181, %s182, %s183
      %p187 = pneg %p181
      %p188 = scmp.eq.s32.totalorder %s17, 1
      %p189 = por %p187, %p188
      %p190 = scmp.ne.s32.totalorder %s182, %s185
      %p191 = scmp.eq.s32.totalorder %s17, 0
      %p192 = por %p190, %p191
      %p193 = scmp.ne.s32.totalorder %s182, %s185
      %p194 = scmp.eq.s32.totalorder %s22, 1
      %p195 = por %p193, %p194
      %p196 = scmp.ne.s32.totalorder %s185, %s186
      %p197 = scmp.eq.s32.totalorder %s22, 0
      %p198 = por %p196, %p197
      %p199 = scmp.ne.s32.totalorder %s185, %s186
      %p200 = scmp.eq.s32.totalorder %s23, 1
      %p201 = por %p199, %p200
      %p203 = scmp.ne.s32.totalorder %s186, %s202
      %p204 = scmp.eq.s32.totalorder %s23, 0
      %p205 = por %p203, %p204
      %p206 = scmp.le.s32.totalorder 1, %s17
      %p207 = scmp.lt.s32.totalorder %s17, 3
      %p208 = pnand %p206, %p207
      %p209 = pneg %p208
      // Predicated region
      $region9: #{tpu_custom_call.1} parent=5 // pred_check
        _
      $region10: #{tpu_custom_call.1} parent=5 // pred_check_branch
        %211 = sbr.rel (%p208) target = $region12
      $region11: #{tpu_custom_call.1} parent=5 // pred_region
        %s212 = ssub.s32 %s17, 1
        // Predicated region
        $region13: #{tpu_custom_call.1} parent=11 // pred_check
          %p213 = pneg %p81
        $region14: #{tpu_custom_call.1} parent=11 // pred_check_branch
          %215 = sbr.rel (%p213) target = $region16
        $region15: #{tpu_custom_call.1} parent=11 // pred_region
          %s216 = smul.u32 3, %s27
          %p217 = scmp.lt.s32.totalorder %s216, 2
          %s218 = scalar_select %p217, %s216, 2
          %s219 = smul.addr %s218, 8
          %s220 = scalar_lea.vmem %s1, %s219
          %s221 = smul.u32 3, %s27
        $region16: #{tpu_custom_call.1} parent=11 // pred_fallthru
          _
        // Predicated region
        $region17: #{tpu_custom_call.1} parent=11 // pred_check
          %p222 = pneg %p102
        $region18: #{tpu_custom_call.1} parent=11 // pred_check_branch
          %224 = sbr.rel (%p222) target = $region20
        $region19: #{tpu_custom_call.1} parent=11 // pred_region
          %s226 = ssub.s32 8192, 8192
          %227 = vsyncadd [#allocation3], %s226
          %s228 = sshll.u32 [#allocation2], 4
          %s229 = int_to_ptr.vmem [resolvable:$true] %s228
          %234 = dma.hbm_to_vmem [thread:$0]  %s2, 8192, %s229, [#allocation3], 256, 256, 16
        $region20: #{tpu_custom_call.1} parent=11 // pred_fallthru
          _
        // Predicated region
        $region21: #{tpu_custom_call.1} parent=11 // pred_check
          %p235 = pneg %p123
        $region22: #{tpu_custom_call.1} parent=11 // pred_check_branch
          %237 = sbr.rel (%p235) target = $region24
        $region23: #{tpu_custom_call.1} parent=11 // pred_region
          %s239 = ssub.s32 8192, 8192
          %240 = vsyncadd [#allocation6], %s239
          %s241 = sshll.u32 [#allocation5], 4
          %s242 = int_to_ptr.vmem [resolvable:$true] %s241
          %247 = dma.hbm_to_vmem [thread:$0]  %s3, 8192, %s242, [#allocation6], 256, 256, 16
        $region24: #{tpu_custom_call.1} parent=11 // pred_fallthru
          _
        // Predicated region
        $region25: #{tpu_custom_call.1} parent=11 // pred_check
          %p248 = pneg %p149
        $region26: #{tpu_custom_call.1} parent=11 // pred_check_branch
          %250 = sbr.rel (%p248) target = $region28
        $region27: #{tpu_custom_call.1} parent=11 // pred_region
          %p251 = scmp.lt.s32.totalorder %s27, 0
          %s252 = scalar_select %p251, %s27, 0
          %s253 = smul.addr %s252, 8
          %s254 = scalar_lea.vmem %s4, %s253
        $region28: #{tpu_custom_call.1} parent=11 // pred_fallthru
          _
        // Predicated region
        $region29: #{tpu_custom_call.1} parent=11 // pred_check
          %p255 = pneg %p170
        $region30: #{tpu_custom_call.1} parent=11 // pred_check_branch
          %257 = sbr.rel (%p255) target = $region32
        $region31: #{tpu_custom_call.1} parent=11 // pred_region
          _
        $region32: #{tpu_custom_call.1} parent=11 // pred_fallthru
          _
      $region12: #{tpu_custom_call.1} parent=5 // pred_fallthru
        _
      %p258 = scmp.lt.s32.totalorder %s17, 2
      // Predicated region
      $region33: #{tpu_custom_call.1} parent=5 // pred_check
        %p259 = pneg %p258
      $region34: #{tpu_custom_call.1} parent=5 // pred_check_branch
        %261 = sbr.rel (%p259) target = $region36
      $region35: #{tpu_custom_call.1} parent=5 // pred_region
        // Predicated region
        $region37: #{tpu_custom_call.1} parent=35 // pred_check
          %p262 = pneg %p49
        $region38: #{tpu_custom_call.1} parent=35 // pred_check_branch
          %264 = sbr.rel (%p262) target = $region40
        $region39: #{tpu_custom_call.1} parent=35 // pred_region
          %p265 = scmp.lt.s32.totalorder %s24, 1
          %s266 = scalar_select %p265, %s24, 1
          %s267 = smul.addr %s266, 2
          %s268 = smul.addr %s267, 8
          %s269 = scalar_lea.vmem %s0, %s268
        $region40: #{tpu_custom_call.1} parent=35 // pred_fallthru
          _
      $region36: #{tpu_custom_call.1} parent=5 // pred_fallthru
        _
      %p270 = scmp.le.s32.totalorder 1, %s17
      %p271 = scmp.lt.s32.totalorder %s17, 3
      %p272 = pnand %p270, %p271
      %p273 = pneg %p272
      // Predicated region
      $region41: #{tpu_custom_call.1} parent=5 // pred_check
        _
      $region42: #{tpu_custom_call.1} parent=5 // pred_check_branch
        %275 = sbr.rel (%p272) target = $region44
      $region43: #{tpu_custom_call.1} parent=5 // pred_region
        %s276 = ssub.s32 %s17, 1
        // Predicated region
        $region45: #{tpu_custom_call.1} parent=43 // pred_check
          %p277 = pneg %p102
        $region46: #{tpu_custom_call.1} parent=43 // pred_check_branch
          %279 = sbr.rel (%p277) target = $region48
        $region47: #{tpu_custom_call.1} parent=43 // pred_region
          %280 = dma.done [#allocation3], 8192
        $region48: #{tpu_custom_call.1} parent=43 // pred_fallthru
          _
        // Predicated region
        $region49: #{tpu_custom_call.1} parent=43 // pred_check
          %p281 = pneg %p123
        $region50: #{tpu_custom_call.1} parent=43 // pred_check_branch
          %283 = sbr.rel (%p281) target = $region52
        $region51: #{tpu_custom_call.1} parent=43 // pred_region
          %284 = dma.done [#allocation6], 8192
        $region52: #{tpu_custom_call.1} parent=43 // pred_fallthru
          _
        %p285 = scmp.lt.s32.totalorder %s26, 1
        %s286 = scalar_select %p285, %s26, 1
        %s287 = smul.addr %s286, 2
        %s288 = smul.addr %s287, 8
        %s289 = scalar_lea.vmem %s0, %s288
        %p290 = pneg %p55
        %p291 = pneg %p52
        %s292 = smul.u32 3, %s27
        %p293 = scmp.lt.s32.totalorder %s292, 2
        %s294 = scalar_select %p293, %s292, 2
        %s295 = smul.addr %s294, 8
        %s296 = scalar_lea.vmem %s1, %s295
        %p297 = pneg %p81
        %p298 = pneg %p78
        %p299 = pneg %p102
        %p300 = pneg %p99
        %p301 = pneg %p123
        %p302 = pneg %p120
        %p303 = scmp.lt.s32.totalorder %s27, 0
        %s304 = scalar_select %p303, %s27, 0
        %s305 = smul.addr %s304, 8
        %s306 = scalar_lea.vmem %s4, %s305
        %p307 = pneg %p149
        %p308 = pneg %p146
        %p309 = pneg %p170
        %p310 = pneg %p167
        %p311 = pneg %p198
        %p312 = pneg %p195
        %s313 = sand.u32 %s185, 1
        %s314 = scalar_lea.sflag [#allocation4], %s313
        %s315 = sand.u32 %s185, 1
        %s316 = smul.addr %s315, 16
        %s317 = scalar_lea.vmem [#allocation7], %s316
        %p318 = scmp.lt.s32.totalorder %s26, 1
        %s319 = scalar_select %p318, %s26, 1
        %s320 = smul.addr %s319, 2
        %s321 = smul.addr %s320, 8
        %s322 = scalar_lea.vmem %s0, %s321
        %s323 = smul.u32 3, %s27
        %p324 = scmp.lt.s32.totalorder %s323, 2
        %s325 = scalar_select %p324, %s323, 2
        %s326 = smul.addr %s325, 8
        %s327 = scalar_lea.vmem %s1, %s326
        %s328 = smul.u32 3, %s27
        %p329 = scmp.lt.s32.totalorder %s27, 0
        %s330 = scalar_select %p329, %s27, 0
        %s331 = smul.addr %s330, 8
        %s332 = scalar_lea.vmem %s4, %s331
        %v333 = vld [vmem:[%s322] sm:$0xff]
        %v334 = vld [vmem:[%s322 + $0x8] sm:$0xff]
        %v335 = vld [vmem:[%s327] sm:$0xff]
        %v336 = vld [vmem:[%s327 + $0x8] sm:$0xff]
        %v337 = vld [vmem:[%s327 + $0x10] sm:$0xff]
        %vm338 = vcmask 64512
        %v340 = vsel %vm338, %v335, 0
        %v343 = vsel %vm338, %v336, 0
        %v346 = vsel %vm338, %v337, 0
        %348 = vmatprep.subr.mxu0 %v334
        %349 = vmatpush1.msra.mxu0 %v333
        %350 = vmatprep.subr.mxu0 0.0
        %351 = vmatpush1.msra.mxu0 0.0
        %352 = vmatprep.subr.mxu0 0.0
        %353 = vmatpush1.msra.mxu0 0.0
        %354 = vmatprep.subr.mxu0 0.0
        %355 = vmatpush1.msra.mxu0 0.0
        %356 = vmatprep.subr.mxu0 0.0
        %357 = vmatpush1.msra.mxu0 0.0
        %358 = vmatprep.subr.mxu0 0.0
        %359 = vmatpush1.msra.mxu0 0.0
        %360 = vmatprep.subr.mxu0 0.0
        %361 = vmatpush1.msra.mxu0 0.0
        %362 = vmatprep.subr.mxu0 0.0
        %363 = vmatpush1.msra.mxu0 0.0
        %364 = vmatprep.subr.mxu0 0.0
        %365 = vmatpush1.msra.mxu0 0.0
        %366 = vmatprep.subr.mxu0 0.0
        %367 = vmatpush1.msra.mxu0 0.0
        %368 = vmatprep.subr.mxu0 0.0
        %369 = vmatpush1.msra.mxu0 0.0
        %370 = vmatprep.subr.mxu0 0.0
        %371 = vmatpush1.msra.mxu0 0.0
        %372 = vmatprep.subr.mxu0 0.0
        %373 = vmatpush1.msra.mxu0 0.0
        %374 = vmatprep.subr.mxu0 0.0
        %375 = vmatpush1.msra.mxu0 0.0
        %376 = vmatprep.subr.mxu0 0.0
        %377 = vmatpush1.msra.mxu0 0.0
        %378 = vmatprep.subr.mxu0 0.0
        %379 = vmatpush1.msra.mxu0 0.0
        %380 = vmatprep.subr.mxu0 0.0
        %381 = vmatpush1.msra.mxu0 0.0
        %382 = vmatprep.subr.mxu0 0.0
        %383 = vmatpush1.msra.mxu0 0.0
        %384 = vmatprep.subr.mxu0 0.0
        %385 = vmatpush1.msra.mxu0 0.0
        %386 = vmatprep.subr.mxu0 0.0
        %387 = vmatpush1.msra.mxu0 0.0
        %388 = vmatprep.subr.mxu0 0.0
        %389 = vmatpush1.msra.mxu0 0.0
        %390 = vmatprep.subr.mxu0 0.0
        %391 = vmatpush1.msra.mxu0 0.0
        %392 = vmatprep.subr.mxu0 0.0
        %393 = vmatpush1.msra.mxu0 0.0
        %394 = vmatprep.subr.mxu0 0.0
        %395 = vmatpush1.msra.mxu0 0.0
        %396 = vmatprep.subr.mxu0 0.0
        %397 = vmatpush1.msra.mxu0 0.0
        %398 = vmatprep.subr.mxu0 0.0
        %399 = vmatpush1.msra.mxu0 0.0
        %400 = vmatprep.subr.mxu0 0.0
        %401 = vmatpush1.msra.mxu0 0.0
        %402 = vmatprep.subr.mxu0 0.0
        %403 = vmatpush1.msra.mxu0 0.0
        %404 = vmatprep.subr.mxu0 0.0
        %405 = vmatpush1.msra.mxu0 0.0
        %406 = vmatprep.subr.mxu0 0.0
        %407 = vmatpush1.msra.mxu0 0.0
        %408 = vmatprep.subr.mxu0 0.0
        %409 = vmatpush1.msra.mxu0 0.0
        %410 = vmatprep.subr.mxu0 0.0
        %411 = vmatpush1.msra.mxu0 0.0
        %412 = vmatprep.mubr.f32.mxu0 0.0
        %413 = vmatmul.mubr.f32.gmra.mrb[0].mxu0 %v340
        %v414 = vpop.f32.mrb[0].mxu0
        %v415 = vadd.f32 0.0, %v414
        %v416 = vpop.f32.mrb[0].mxu0
        %v417 = vadd.f32 0.0, %v416
        %418 = vmatprep.mubr.f32.mxu0 0.0
        %419 = vmatmul.mubr.f32.gmra.mrb[0].mxu0 %v343
        %v420 = vpop.f32.mrb[0].mxu0
        %v421 = vadd.f32 0.0, %v420
        %v422 = vpop.f32.mrb[0].mxu0
        %v423 = vadd.f32 0.0, %v422
        %424 = vmatprep.mubr.f32.mxu0 0.0
        %425 = vmatmul.mubr.f32.gmra.mrb[0].mxu0 %v346
        %v426 = vpop.f32.mrb[0].mxu0
        %v427 = vadd.f32 0.0, %v426
        %v428 = vpop.f32.mrb[0].mxu0
        %v429 = vadd.f32 0.0, %v428
        %430 = vdwg.mxu0
        %v431 = vld [vmem:[%s332] sm:$0xff]
        %v432 = vld [vmem:[%s5] sm:$0xf]
        %434 = vset.pattern.permute.xlu0 0
        %435 = vperm.xlu0 %434, %v431
        %v436 = vpop.permute.xlu0 %435
        %v439 = vlaneseq
        %v440 = vshrl.u32 %v439, 7
        %v441 = vsub.s32 0, %v440
        %v442 = vrot.slane %v432, %v441
        %v443 = vlaneseq
        %v444 = vshrl.u32 %v443, 7
        %v445 = vsub.s32 2, %v444
        %v446 = vrot.slane %v432, %v445
        %v449 = vlaneseq
        %v450 = vshrl.u32 %v449, 7
        %v451 = vsub.s32 0, %v450
        %v452 = vrot.slane %v442, %v451
        %v453 = vlaneseq
        %v454 = vshrl.u32 %v453, 7
        %v455 = vsub.s32 0, %v454
        %v456 = vrot.slane %v446, %v455
        %v457 = vmul.f32 %v436, %v452
        %v458 = vmul.f32 %v436, %v456
        %v459 = vadd.f32 %v427, %v457
        %v460 = vadd.f32 %v429, %v458
        %461 = vset.pattern.permute.xlu0 1
        %462 = vperm.xlu0 %461, %v431
        %v463 = vpop.permute.xlu0 %462
        %v465 = vlaneseq
        %v466 = vshrl.u32 %v465, 7
        %v467 = vsub.s32 1, %v466
        %v468 = vrot.slane %v432, %v467
        %v469 = vlaneseq
        %v470 = vshrl.u32 %v469, 7
        %v471 = vsub.s32 3, %v470
        %v472 = vrot.slane %v432, %v471
        %v475 = vlaneseq
        %v476 = vshrl.u32 %v475, 7
        %v477 = vsub.s32 1, %v476
        %v478 = vrot.slane %v468, %v477
        %v479 = vlaneseq
        %v480 = vshrl.u32 %v479, 7
        %v481 = vsub.s32 1, %v480
        %v482 = vrot.slane %v472, %v481
        %v483 = vmul.f32 %v463, %v478
        %v484 = vmul.f32 %v463, %v482
        %v485 = vadd.f32 %v459, %v483
        %v486 = vadd.f32 %v460, %v484
        %487 = vset.pattern.permute.xlu0 2
        %488 = vperm.xlu0 %487, %v431
        %v489 = vpop.permute.xlu0 %488
        %v491 = vadd.f32 %v485, %v489
        %v492 = vadd.f32 %v486, %v489
        %v493 = vld [vmem:[#allocation2] sm:$0xff]
        %v494 = vld [vmem:[#allocation2 + $0x8] sm:$0xff]
        %v495 = vld [vmem:[#allocation2 + $0x10] sm:$0xff]
        %v496 = vld [vmem:[#allocation2 + $0x18] sm:$0xff]
        %v497 = vld [vmem:[#allocation2 + $0x20] sm:$0xff]
        %v498 = vld [vmem:[#allocation2 + $0x28] sm:$0xff]
        %v499 = vld [vmem:[#allocation2 + $0x30] sm:$0xff]
        %v500 = vld [vmem:[#allocation2 + $0x38] sm:$0xff]
        %v501 = vld [vmem:[#allocation2 + $0x40] sm:$0xff]
        %v502 = vld [vmem:[#allocation2 + $0x48] sm:$0xff]
        %v503 = vld [vmem:[#allocation2 + $0x50] sm:$0xff]
        %v504 = vld [vmem:[#allocation2 + $0x58] sm:$0xff]
        %v505 = vld [vmem:[#allocation2 + $0x60] sm:$0xff]
        %v506 = vld [vmem:[#allocation2 + $0x68] sm:$0xff]
        %v507 = vld [vmem:[#allocation2 + $0x70] sm:$0xff]
        %v508 = vld [vmem:[#allocation2 + $0x78] sm:$0xff]
        %v509 = vld [vmem:[#allocation2 + $0x80] sm:$0xff]
        %v510 = vld [vmem:[#allocation2 + $0x88] sm:$0xff]
        %v511 = vld [vmem:[#allocation2 + $0x90] sm:$0xff]
        %v512 = vld [vmem:[#allocation2 + $0x98] sm:$0xff]
        %v513 = vld [vmem:[#allocation2 + $0xa0] sm:$0xff]
        %v514 = vld [vmem:[#allocation2 + $0xa8] sm:$0xff]
        %v515 = vld [vmem:[#allocation2 + $0xb0] sm:$0xff]
        %v516 = vld [vmem:[#allocation2 + $0xb8] sm:$0xff]
        %v517 = vld [vmem:[#allocation2 + $0xc0] sm:$0xff]
        %v518 = vld [vmem:[#allocation2 + $0xc8] sm:$0xff]
        %v519 = vld [vmem:[#allocation2 + $0xd0] sm:$0xff]
        %v520 = vld [vmem:[#allocation2 + $0xd8] sm:$0xff]
        %v521 = vld [vmem:[#allocation2 + $0xe0] sm:$0xff]
        %v522 = vld [vmem:[#allocation2 + $0xe8] sm:$0xff]
        %v523 = vld [vmem:[#allocation2 + $0xf0] sm:$0xff]
        %v524 = vld [vmem:[#allocation2 + $0xf8] sm:$0xff]
        %v525 = vld [vmem:[#allocation2 + $0x100] sm:$0xff]
        %v526 = vld [vmem:[#allocation2 + $0x108] sm:$0xff]
        %v527 = vld [vmem:[#allocation2 + $0x110] sm:$0xff]
        %v528 = vld [vmem:[#allocation2 + $0x118] sm:$0xff]
        %v529 = vld [vmem:[#allocation2 + $0x120] sm:$0xff]
        %v530 = vld [vmem:[#allocation2 + $0x128] sm:$0xff]
        %v531 = vld [vmem:[#allocation2 + $0x130] sm:$0xff]
        %v532 = vld [vmem:[#allocation2 + $0x138] sm:$0xff]
        %v533 = vld [vmem:[#allocation2 + $0x140] sm:$0xff]
        %v534 = vld [vmem:[#allocation2 + $0x148] sm:$0xff]
        %v535 = vld [vmem:[#allocation2 + $0x150] sm:$0xff]
        %v536 = vld [vmem:[#allocation2 + $0x158] sm:$0xff]
        %v537 = vld [vmem:[#allocation2 + $0x160] sm:$0xff]
        %v538 = vld [vmem:[#allocation2 + $0x168] sm:$0xff]
        %v539 = vld [vmem:[#allocation2 + $0x170] sm:$0xff]
        %v540 = vld [vmem:[#allocation2 + $0x178] sm:$0xff]
        %v541 = vld [vmem:[#allocation2 + $0x180] sm:$0xff]
        %v542 = vld [vmem:[#allocation2 + $0x188] sm:$0xff]
        %v543 = vld [vmem:[#allocation2 + $0x190] sm:$0xff]
        %v544 = vld [vmem:[#allocation2 + $0x198] sm:$0xff]
        %v545 = vld [vmem:[#allocation2 + $0x1a0] sm:$0xff]
        %v546 = vld [vmem:[#allocation2 + $0x1a8] sm:$0xff]
        %v547 = vld [vmem:[#allocation2 + $0x1b0] sm:$0xff]
        %v548 = vld [vmem:[#allocation2 + $0x1b8] sm:$0xff]
        %v549 = vld [vmem:[#allocation2 + $0x1c0] sm:$0xff]
        %v550 = vld [vmem:[#allocation2 + $0x1c8] sm:$0xff]
        %v551 = vld [vmem:[#allocation2 + $0x1d0] sm:$0xff]
        %v552 = vld [vmem:[#allocation2 + $0x1d8] sm:$0xff]
        %v553 = vld [vmem:[#allocation2 + $0x1e0] sm:$0xff]
        %v554 = vld [vmem:[#allocation2 + $0x1e8] sm:$0xff]
        %v555 = vld [vmem:[#allocation2 + $0x1f0] sm:$0xff]
        %v556 = vld [vmem:[#allocation2 + $0x1f8] sm:$0xff]
        %557 = vmatprep.subr.mxu0 %v494
        %558 = vmatpush1.msra.mxu0 %v493
        %559 = vmatprep.subr.mxu0 %v496
        %560 = vmatpush1.msra.mxu0 %v495
        %561 = vmatprep.subr.mxu0 %v498
        %562 = vmatpush1.msra.mxu0 %v497
        %563 = vmatprep.subr.mxu0 %v500
        %564 = vmatpush1.msra.mxu0 %v499
        %565 = vmatprep.subr.mxu0 %v502
        %566 = vmatpush1.msra.mxu0 %v501
        %567 = vmatprep.subr.mxu0 %v504
        %568 = vmatpush1.msra.mxu0 %v503
        %569 = vmatprep.subr.mxu0 %v506
        %570 = vmatpush1.msra.mxu0 %v505
        %571 = vmatprep.subr.mxu0 %v508
        %572 = vmatpush1.msra.mxu0 %v507
        %573 = vmatprep.subr.mxu0 %v510
        %574 = vmatpush1.msra.mxu0 %v509
        %575 = vmatprep.subr.mxu0 %v512
        %576 = vmatpush1.msra.mxu0 %v511
        %577 = vmatprep.subr.mxu0 %v514
        %578 = vmatpush1.msra.mxu0 %v513
        %579 = vmatprep.subr.mxu0 %v516
        %580 = vmatpush1.msra.mxu0 %v515
        %581 = vmatprep.subr.mxu0 %v518
        %582 = vmatpush1.msra.mxu0 %v517
        %583 = vmatprep.subr.mxu0 %v520
        %584 = vmatpush1.msra.mxu0 %v519
        %585 = vmatprep.subr.mxu0 %v522
        %586 = vmatpush1.msra.mxu0 %v521
        %587 = vmatprep.subr.mxu0 %v524
        %588 = vmatpush1.msra.mxu0 %v523
        %589 = vmatprep.subr.mxu0 %v526
        %590 = vmatpush1.msra.mxu0 %v525
        %591 = vmatprep.subr.mxu0 %v528
        %592 = vmatpush1.msra.mxu0 %v527
        %593 = vmatprep.subr.mxu0 %v530
        %594 = vmatpush1.msra.mxu0 %v529
        %595 = vmatprep.subr.mxu0 %v532
        %596 = vmatpush1.msra.mxu0 %v531
        %597 = vmatprep.subr.mxu0 %v534
        %598 = vmatpush1.msra.mxu0 %v533
        %599 = vmatprep.subr.mxu0 %v536
        %600 = vmatpush1.msra.mxu0 %v535
        %601 = vmatprep.subr.mxu0 %v538
        %602 = vmatpush1.msra.mxu0 %v537
        %603 = vmatprep.subr.mxu0 %v540
        %604 = vmatpush1.msra.mxu0 %v539
        %605 = vmatprep.subr.mxu0 %v542
        %606 = vmatpush1.msra.mxu0 %v541
        %607 = vmatprep.subr.mxu0 %v544
        %608 = vmatpush1.msra.mxu0 %v543
        %609 = vmatprep.subr.mxu0 %v546
        %610 = vmatpush1.msra.mxu0 %v545
        %611 = vmatprep.subr.mxu0 %v548
        %612 = vmatpush1.msra.mxu0 %v547
        %613 = vmatprep.subr.mxu0 %v550
        %614 = vmatpush1.msra.mxu0 %v549
        %615 = vmatprep.subr.mxu0 %v552
        %616 = vmatpush1.msra.mxu0 %v551
        %617 = vmatprep.subr.mxu0 %v554
        %618 = vmatpush1.msra.mxu0 %v553
        %619 = vmatprep.subr.mxu0 %v556
        %620 = vmatpush1.msra.mxu0 %v555
        %621 = vmatprep.mubr.f32.mxu0 %v417
        %622 = vmatmul.mubr.f32.gmra.mrb[0].mxu0 %v415
        %v623 = vpop.f32.mrb[0].mxu0
        %v624 = vadd.f32 0.0, %v623
        %v625 = vpop.f32.mrb[0].mxu0
        %v626 = vadd.f32 0.0, %v625
        %627 = vdwg.mxu0
        %v628 = vadd.f32 %v491, %v624
        %v629 = vadd.f32 %v492, %v626
        %v630 = vld [vmem:[#allocation5] sm:$0xff]
        %v631 = vld [vmem:[#allocation5 + $0x8] sm:$0xff]
        %v632 = vld [vmem:[#allocation5 + $0x10] sm:$0xff]
        %v633 = vld [vmem:[#allocation5 + $0x18] sm:$0xff]
        %v634 = vld [vmem:[#allocation5 + $0x20] sm:$0xff]
        %v635 = vld [vmem:[#allocation5 + $0x28] sm:$0xff]
        %v636 = vld [vmem:[#allocation5 + $0x30] sm:$0xff]
        %v637 = vld [vmem:[#allocation5 + $0x38] sm:$0xff]
        %v638 = vld [vmem:[#allocation5 + $0x40] sm:$0xff]
        %v639 = vld [vmem:[#allocation5 + $0x48] sm:$0xff]
        %v640 = vld [vmem:[#allocation5 + $0x50] sm:$0xff]
        %v641 = vld [vmem:[#allocation5 + $0x58] sm:$0xff]
        %v642 = vld [vmem:[#allocation5 + $0x60] sm:$0xff]
        %v643 = vld [vmem:[#allocation5 + $0x68] sm:$0xff]
        %v644 = vld [vmem:[#allocation5 + $0x70] sm:$0xff]
        %v645 = vld [vmem:[#allocation5 + $0x78] sm:$0xff]
        %v646 = vld [vmem:[#allocation5 + $0x80] sm:$0xff]
        %v647 = vld [vmem:[#allocation5 + $0x88] sm:$0xff]
        %v648 = vld [vmem:[#allocation5 + $0x90] sm:$0xff]
        %v649 = vld [vmem:[#allocation5 + $0x98] sm:$0xff]
        %v650 = vld [vmem:[#allocation5 + $0xa0] sm:$0xff]
        %v651 = vld [vmem:[#allocation5 + $0xa8] sm:$0xff]
        %v652 = vld [vmem:[#allocation5 + $0xb0] sm:$0xff]
        %v653 = vld [vmem:[#allocation5 + $0xb8] sm:$0xff]
        %v654 = vld [vmem:[#allocation5 + $0xc0] sm:$0xff]
        %v655 = vld [vmem:[#allocation5 + $0xc8] sm:$0xff]
        %v656 = vld [vmem:[#allocation5 + $0xd0] sm:$0xff]
        %v657 = vld [vmem:[#allocation5 + $0xd8] sm:$0xff]
        %v658 = vld [vmem:[#allocation5 + $0xe0] sm:$0xff]
        %v659 = vld [vmem:[#allocation5 + $0xe8] sm:$0xff]
        %v660 = vld [vmem:[#allocation5 + $0xf0] sm:$0xff]
        %v661 = vld [vmem:[#allocation5 + $0xf8] sm:$0xff]
        %v662 = vld [vmem:[#allocation5 + $0x100] sm:$0xff]
        %v663 = vld [vmem:[#allocation5 + $0x108] sm:$0xff]
        %v664 = vld [vmem:[#allocation5 + $0x110] sm:$0xff]
        %v665 = vld [vmem:[#allocation5 + $0x118] sm:$0xff]
        %v666 = vld [vmem:[#allocation5 + $0x120] sm:$0xff]
        %v667 = vld [vmem:[#allocation5 + $0x128] sm:$0xff]
        %v668 = vld [vmem:[#allocation5 + $0x130] sm:$0xff]
        %v669 = vld [vmem:[#allocation5 + $0x138] sm:$0xff]
        %v670 = vld [vmem:[#allocation5 + $0x140] sm:$0xff]
        %v671 = vld [vmem:[#allocation5 + $0x148] sm:$0xff]
        %v672 = vld [vmem:[#allocation5 + $0x150] sm:$0xff]
        %v673 = vld [vmem:[#allocation5 + $0x158] sm:$0xff]
        %v674 = vld [vmem:[#allocation5 + $0x160] sm:$0xff]
        %v675 = vld [vmem:[#allocation5 + $0x168] sm:$0xff]
        %v676 = vld [vmem:[#allocation5 + $0x170] sm:$0xff]
        %v677 = vld [vmem:[#allocation5 + $0x178] sm:$0xff]
        %v678 = vld [vmem:[#allocation5 + $0x180] sm:$0xff]
        %v679 = vld [vmem:[#allocation5 + $0x188] sm:$0xff]
        %v680 = vld [vmem:[#allocation5 + $0x190] sm:$0xff]
        %v681 = vld [vmem:[#allocation5 + $0x198] sm:$0xff]
        %v682 = vld [vmem:[#allocation5 + $0x1a0] sm:$0xff]
        %v683 = vld [vmem:[#allocation5 + $0x1a8] sm:$0xff]
        %v684 = vld [vmem:[#allocation5 + $0x1b0] sm:$0xff]
        %v685 = vld [vmem:[#allocation5 + $0x1b8] sm:$0xff]
        %v686 = vld [vmem:[#allocation5 + $0x1c0] sm:$0xff]
        %v687 = vld [vmem:[#allocation5 + $0x1c8] sm:$0xff]
        %v688 = vld [vmem:[#allocation5 + $0x1d0] sm:$0xff]
        %v689 = vld [vmem:[#allocation5 + $0x1d8] sm:$0xff]
        %v690 = vld [vmem:[#allocation5 + $0x1e0] sm:$0xff]
        %v691 = vld [vmem:[#allocation5 + $0x1e8] sm:$0xff]
        %v692 = vld [vmem:[#allocation5 + $0x1f0] sm:$0xff]
        %v693 = vld [vmem:[#allocation5 + $0x1f8] sm:$0xff]
        %694 = vmatprep.subr.mxu0 %v631
        %695 = vmatpush1.msra.mxu0 %v630
        %696 = vmatprep.subr.mxu0 %v633
        %697 = vmatpush1.msra.mxu0 %v632
        %698 = vmatprep.subr.mxu0 %v635
        %699 = vmatpush1.msra.mxu0 %v634
        %700 = vmatprep.subr.mxu0 %v637
        %701 = vmatpush1.msra.mxu0 %v636
        %702 = vmatprep.subr.mxu0 %v639
        %703 = vmatpush1.msra.mxu0 %v638
        %704 = vmatprep.subr.mxu0 %v641
        %705 = vmatpush1.msra.mxu0 %v640
        %706 = vmatprep.subr.mxu0 %v643
        %707 = vmatpush1.msra.mxu0 %v642
        %708 = vmatprep.subr.mxu0 %v645
        %709 = vmatpush1.msra.mxu0 %v644
        %710 = vmatprep.subr.mxu0 %v647
        %711 = vmatpush1.msra.mxu0 %v646
        %712 = vmatprep.subr.mxu0 %v649
        %713 = vmatpush1.msra.mxu0 %v648
        %714 = vmatprep.subr.mxu0 %v651
        %715 = vmatpush1.msra.mxu0 %v650
        %716 = vmatprep.subr.mxu0 %v653
        %717 = vmatpush1.msra.mxu0 %v652
        %718 = vmatprep.subr.mxu0 %v655
        %719 = vmatpush1.msra.mxu0 %v654
        %720 = vmatprep.subr.mxu0 %v657
        %721 = vmatpush1.msra.mxu0 %v656
        %722 = vmatprep.subr.mxu0 %v659
        %723 = vmatpush1.msra.mxu0 %v658
        %724 = vmatprep.subr.mxu0 %v661
        %725 = vmatpush1.msra.mxu0 %v660
        %726 = vmatprep.subr.mxu0 %v663
        %727 = vmatpush1.msra.mxu0 %v662
        %728 = vmatprep.subr.mxu0 %v665
        %729 = vmatpush1.msra.mxu0 %v664
        %730 = vmatprep.subr.mxu0 %v667
        %731 = vmatpush1.msra.mxu0 %v666
        %732 = vmatprep.subr.mxu0 %v669
        %733 = vmatpush1.msra.mxu0 %v668
        %734 = vmatprep.subr.mxu0 %v671
        %735 = vmatpush1.msra.mxu0 %v670
        %736 = vmatprep.subr.mxu0 %v673
        %737 = vmatpush1.msra.mxu0 %v672
        %738 = vmatprep.subr.mxu0 %v675
        %739 = vmatpush1.msra.mxu0 %v674
        %740 = vmatprep.subr.mxu0 %v677
        %741 = vmatpush1.msra.mxu0 %v676
        %742 = vmatprep.subr.mxu0 %v679
        %743 = vmatpush1.msra.mxu0 %v678
        %744 = vmatprep.subr.mxu0 %v681
        %745 = vmatpush1.msra.mxu0 %v680
        %746 = vmatprep.subr.mxu0 %v683
        %747 = vmatpush1.msra.mxu0 %v682
        %748 = vmatprep.subr.mxu0 %v685
        %749 = vmatpush1.msra.mxu0 %v684
        %750 = vmatprep.subr.mxu0 %v687
        %751 = vmatpush1.msra.mxu0 %v686
        %752 = vmatprep.subr.mxu0 %v689
        %753 = vmatpush1.msra.mxu0 %v688
        %754 = vmatprep.subr.mxu0 %v691
        %755 = vmatpush1.msra.mxu0 %v690
        %756 = vmatprep.subr.mxu0 %v693
        %757 = vmatpush1.msra.mxu0 %v692
        %758 = vmatprep.mubr.f32.mxu0 %v423
        %759 = vmatmul.mubr.f32.gmra.mrb[0].mxu0 %v421
        %v760 = vpop.f32.mrb[0].mxu0
        %v761 = vadd.f32 0.0, %v760
        %v762 = vpop.f32.mrb[0].mxu0
        %v763 = vadd.f32 0.0, %v762
        %764 = vdwg.mxu0
        %v765 = vadd.f32 %v628, %v761
        %v766 = vadd.f32 %v629, %v763
        %767 = vst [vmem:[%s317] sm:$0xff] %v765
        %768 = vst [vmem:[%s317 + $0x8] sm:$0xff] %v766
        %s769 = sand.u32 %s185, 1
        %s770 = scalar_lea.sflag [#allocation4], %s769
        %s771 = sand.u32 %s185, 1
        %s772 = smul.addr %s771, 16
        %s773 = scalar_lea.vmem [#allocation7], %s772
        // Predicated region
        $region53: #{tpu_custom_call.1} parent=43 // pred_check
          %p774 = pneg %p195
        $region54: #{tpu_custom_call.1} parent=43 // pred_check_branch
          %776 = sbr.rel (%p774) target = $region56
        $region55: #{tpu_custom_call.1} parent=43 // pred_region
          %s778 = ssub.s32 256, 256
          %779 = vsyncadd %s770, %s778
          %s780 = smul.addr %s27, 2
          %s781 = smul.addr %s26, 2
          %s782 = sadd.s32 %s780, %s781
          %s783 = smul.addr %s782, 128
          %s784 = scalar_lea.hbm %s6, %s783
          %s786 = sshll.u32 %s773, 4
          %s787 = int_to_ptr.vmem [resolvable:$true] %s786
          %789 = dma.vmem_to_hbm [thread:$0]  %s787, 256, %s784, %s770
        $region56: #{tpu_custom_call.1} parent=43 // pred_fallthru
          _
      $region44: #{tpu_custom_call.1} parent=5 // pred_fallthru
        _
      %p790 = scmp.le.s32.totalorder 2, %s17
      // Predicated region
      $region57: #{tpu_custom_call.1} parent=5 // pred_check
        %p791 = pneg %p790
      $region58: #{tpu_custom_call.1} parent=5 // pred_check_branch
        %793 = sbr.rel (%p791) target = $region60
      $region59: #{tpu_custom_call.1} parent=5 // pred_region
        %s794 = ssub.s32 %s17, 2
        // Predicated region
        $region61: #{tpu_custom_call.1} parent=59 // pred_check
          %p795 = pneg %p201
        $region62: #{tpu_custom_call.1} parent=59 // pred_check_branch
          %797 = sbr.rel (%p795) target = $region64
        $region63: #{tpu_custom_call.1} parent=59 // pred_region
          %s798 = sand.u32 %s186, 1
          %s799 = scalar_lea.sflag [#allocation4], %s798
          %s800 = sand.u32 %s186, 1
          %s801 = smul.addr %s800, 16
          %s802 = scalar_lea.vmem [#allocation7], %s801
          %803 = dma.done %s799, 256
        $region64: #{tpu_custom_call.1} parent=59 // pred_fallthru
          _
      $region60: #{tpu_custom_call.1} parent=5 // pred_fallthru
        _
    $region6: #{tpu_custom_call.1} parent=1 // loop_footer
      %s21 = sadd.s32 1, %s17
    $region7: #{tpu_custom_call.1} parent=1 // loop_footer_branch
      %16 = sbr.rel target = $region3
    $region8: #{tpu_custom_call.1} parent=1 // loop_exit
      _
    %804 = vsyncpa [#allocation3], 1
    %s805 = scalar_lea.sflag [#allocation3], 1
    %806 = vsyncpa %s805, 1
    %807 = vsyncpa [#allocation6], 1
    %808 = vsyncpa [#allocation4], 1
    %s809 = scalar_lea.sflag [#allocation4], 1
    %810 = vsyncpa %s809, 1

</llo_original>
